<compile_context>
chip_gen: v7x
topology: tpu7x:2x2x1
jax: 0.10.0
libtpu: 0.0.40
codegen_flags: <defaults>
</compile_context>

<pallas_src>
import math

import jax
import jax.numpy as jnp
from jax.experimental import pallas as pl
from jax.experimental.pallas import tpu as pltpu


def _copy_kernel(x_ref, o_ref):
    # Identity copy of the current VMEM tile (all a `view` does to data).
    o_ref[...] = x_ref[...]


def _resolve_size(total, size):
    """Resolve a single -1 like torch.view, with strict divisibility checks."""
    size = tuple(int(s) for s in size)
    if size.count(-1) > 1:
        raise ValueError("only one dimension may be -1 in view size")
    if -1 in size:
        known = 1
        for s in size:
            if s != -1:
                known *= s
        if known == 0 or total % known != 0:
            raise ValueError(f"cannot view {total} elements as {size}")
        size = tuple(total // known if s == -1 else s for s in size)
    if math.prod(size) != total:
        raise ValueError(f"view size {size} incompatible with {total} elements")
    return size


def _pick_layout(total, itemsize):
    """Choose a lane-dense (rows, cols) slab and a sublane-aligned row tile."""
    cols = None
    for c in (1024, 512, 256, 128):  # widest lane-dense last dim that divides
        if total % c == 0:
            cols = c
            break
    if cols is None:
        # Odd total: single whole-array block (block == full dims is legal).
        # TODO(synk): pad odd totals to a lane-dense slab instead of one block.
        return 1, total, 1

    rows = total // cols
    sub = 32 // itemsize            # sublane packing: 8 (f32) / 16 (bf16) / 32 (i8)
    target_block_bytes = 1 << 20    # ~1 MiB/block: amortizes ~0.35us step overhead,
                                    # in+out double-buffered ~4 MiB resident VMEM.
    tile_r = max(sub, (target_block_bytes // (cols * itemsize)) // sub * sub)
    if tile_r >= rows:
        tile_r = rows               # whole array in one block (== full dims, legal)
    return rows, cols, tile_r


def pallas_view(x, size):
    """Equivalent of torch `x.view(size)` backed by a tiled Pallas copy kernel."""
    total = x.size
    size = _resolve_size(total, size)
    itemsize = jnp.dtype(x.dtype).itemsize

    rows, cols, tile_r = _pick_layout(total, itemsize)
    flat = x.reshape(rows, cols)

    out_flat = pl.pallas_call(
        _copy_kernel,
        out_shape=jax.ShapeDtypeStruct((rows, cols), x.dtype),
        grid_spec=pltpu.PrefetchScalarGridSpec(
            num_scalar_prefetch=0,
            grid=(pl.cdiv(rows, tile_r),),
            in_specs=[pl.BlockSpec((tile_r, cols), lambda i: (i, 0))],
            out_specs=pl.BlockSpec((tile_r, cols), lambda i: (i, 0)),
        ),
        compiler_params=pltpu.CompilerParams(
            dimension_semantics=("parallel",),   # shards across TCs on v7x
        ),
        cost_estimate=pl.CostEstimate(
            flops=0,
            transcendentals=0,
            bytes_accessed=2 * total * itemsize,
        ),
    )(flat)

    # Metadata-only reshape to the requested view size (plain-JAX glue).
    return out_flat.reshape(size)


if __name__ == "__main__":
    key = jax.random.PRNGKey(0)

    # Small NCHW-style input, as a conv feature map would be.
    x = jax.random.normal(key, (2, 4, 16, 16), dtype=jnp.float32)

    # View(size) with size = (2, -1) -> (2, 1024), a typical flatten-to-FC view.
    y = pallas_view(x, (2, -1))
    jax.block_until_ready(y)
    y_ref = x.reshape(2, 4 * 16 * 16)
    assert y.shape == y_ref.shape and y.dtype == x.dtype
    assert bool(jnp.allclose(y, y_ref)), "mismatch vs reference view"

    # Odd-total fallback path (total=105, not a multiple of 128).
    z = jax.random.normal(jax.random.PRNGKey(1), (3, 5, 7), dtype=jnp.float32)
    w = pallas_view(z, (7, -1))
    jax.block_until_ready(w)
    assert bool(jnp.allclose(w, z.reshape(7, 15))), "mismatch on odd-size view"

    print("KERNEL_OK")
</pallas_src>

<mosaic_0001>
module attributes {stable_mosaic.version = 11 : i64} {
  func.func @_copy_kernel(%arg0: i32, %arg1: memref<2x1024xf32, #tpu.memory_space<vmem>>, %arg2: memref<2x1024xf32, #tpu.memory_space<vmem>>) attributes {dimension_semantics = [#tpu.dimension_semantics<parallel>], iteration_bounds = array<i64: 1>, scalar_prefetch = 0 : i64, scratch_operands = 0 : i64, tpu.core_type = #tpu.core_type<tc>, window_params = [{transform_indices = @transform_0, window_bounds = array<i64: 2, 1024>}, {transform_indices = @transform_1, window_bounds = array<i64: 2, 1024>}]} {
    %c0 = arith.constant 0 : index
    %c0_0 = arith.constant 0 : index
    %0 = vector.load %arg1[%c0, %c0_0] : memref<2x1024xf32, #tpu.memory_space<vmem>>, vector<2x1024xf32>
    %c0_1 = arith.constant 0 : index
    %c0_2 = arith.constant 0 : index
    %1 = vector.load %arg2[%c0_1, %c0_2] : memref<2x1024xf32, #tpu.memory_space<vmem>>, vector<2x1024xf32>
    tpu.vector_store %arg2[%c0_1, %c0_2], %0 {strides = array<i32>} : memref<2x1024xf32, #tpu.memory_space<vmem>>, vector<2x1024xf32>,
    return
  }
  func.func @transform_0(%arg0: i32) -> (i32, i32) {
    %c0_i32 = arith.constant 0 : i32
    %c0_i32_0 = arith.constant 0 : i32
    return %arg0, %c0_i32 : i32, i32
  }
  func.func @transform_1(%arg0: i32) -> (i32, i32) {
    %c0_i32 = arith.constant 0 : i32
    %c0_i32_0 = arith.constant 0 : i32
    return %arg0, %c0_i32 : i32, i32
  }
}

</mosaic_0001>

<llo_original>
// kernel: tpu_custom_call.1
$region0: #{tpu_custom_call.1}
  #allocation0 [shape = 'u32[]', space=smem, size = 0x4, offset = 0x4, fixed_abs, tag = 'smem constant byte address 0x4 - core index']
  #allocation1 [shape = 'u32[144,128]{1,0:T(1,128)}', space=vmem, size = 0x12000, scoped, tag = 'internal scratch']
  %s0 = inlined_call_operand.hbm [shape: f32[2,1024], index: 0, kind: input, shape index: {}]
  %s1 = inlined_call_operand.hbm [shape: f32[2,1024], index: 1, kind: output, shape index: {}]
  %s2 = sld [smem:[#allocation0]]
  $region18: #{tpu_custom_call.1} parent=0
    _
  %s4 = ssub.s32 1, %s2
  %s5 = scalar_select 0, %s4, %s2
  $region1: #{tpu_custom_call.1} parent=0
    #allocation2 [shape = 'u8[8192]{0}', space=vmem, size = 0x2000, scoped, tag = 'input window, operand 0, single buffered']
    #allocation3 [shape = 's32[1]{0}', space=sflag, size = 0x4, scoped, tag = 'scoped memory for tpu_custom_call.1']
    #allocation4 [shape = 's32[1]{0}', space=sflag, size = 0x4, scoped, tag = 'scoped memory for tpu_custom_call.1']
    #allocation5 [shape = 'u8[8192]{0}', space=vmem, size = 0x2000, scoped, tag = 'output window, operand 0, single buffered']
    %6 = vsyncpa [#allocation3], 0
    %7 = vsyncpa [#allocation4], 0
    // Predicated region
    $region2: #{tpu_custom_call.1} parent=1 // pred_check
      _
    $region3: #{tpu_custom_call.1} parent=1 // pred_check_branch
      %9 = sbr.rel (0) target = $region5
    $region4: #{tpu_custom_call.1} parent=1 // pred_region
      %s11 = ssub.s32 256, 256
      %12 = vsyncadd [#allocation3], %s11
      %s14 = sshll.u32 [#allocation2], 4
      %s15 = int_to_ptr.vmem [resolvable:$true] %s14
      %17 = dma.hbm_to_vmem [thread:$0]  %s0, 256, %s15, [#allocation3]
    $region5: #{tpu_custom_call.1} parent=1 // pred_fallthru
      _
    // Predicated region
    $region6: #{tpu_custom_call.1} parent=1 // pred_check
      _
    $region7: #{tpu_custom_call.1} parent=1 // pred_check_branch
      %19 = sbr.rel (0) target = $region9
    $region8: #{tpu_custom_call.1} parent=1 // pred_region
      %20 = dma.done [#allocation3], 256
    $region9: #{tpu_custom_call.1} parent=1 // pred_fallthru
      _
    %v21 = vld [vmem:[#allocation2] sm:$0xff]
    %v22 = vld [vmem:[#allocation2 + $0x8] sm:$0xff]
    %23 = vst [vmem:[#allocation5] sm:$0xff] %v21
    %24 = vst [vmem:[#allocation5 + $0x8] sm:$0xff] %v22
    // Predicated region
    $region10: #{tpu_custom_call.1} parent=1 // pred_check
      _
    $region11: #{tpu_custom_call.1} parent=1 // pred_check_branch
      %26 = sbr.rel (0) target = $region13
    $region12: #{tpu_custom_call.1} parent=1 // pred_region
      %s28 = ssub.s32 256, 256
      %29 = vsyncadd [#allocation4], %s28
      %s31 = sshll.u32 [#allocation5], 4
      %s32 = int_to_ptr.vmem [resolvable:$true] %s31
      %34 = dma.vmem_to_hbm [thread:$0]  %s32, 256, %s1, [#allocation4]
    $region13: #{tpu_custom_call.1} parent=1 // pred_fallthru
      _
    // Predicated region
    $region14: #{tpu_custom_call.1} parent=1 // pred_check
      _
    $region15: #{tpu_custom_call.1} parent=1 // pred_check_branch
      %36 = sbr.rel (0) target = $region17
    $region16: #{tpu_custom_call.1} parent=1 // pred_region
      %37 = dma.done [#allocation4], 256
    $region17: #{tpu_custom_call.1} parent=1 // pred_fallthru
      _
    %38 = vsyncpa [#allocation3], 1
    %39 = vsyncpa [#allocation4], 1

</llo_original>
